<compile_context>
chip_gen: v7x
topology: tpu7x:2x2x1
jax: 0.10.0
libtpu: 0.0.40
codegen_flags: <defaults>
</compile_context>

<pallas_src>
import jax
import jax.numpy as jnp
from jax.experimental import pallas as pl
from jax.experimental.pallas import tpu as pltpu

IN_DIM = 768
HID_DIM = 512
OUT_DIM = 1


def _round_up(x, m):
    return ((x + m - 1) // m) * m


def _cdiv(a, b):
    return -(-a // b)


def _choose_tile_b(B, *, tile_max=2048):
    """Batch-tile selection.

    - multiples of 8 (f32 sublane constraint on the x block);
    - for large B: >=2 tiles (v7x dual-TC sharding on the "parallel" axis),
      each a multiple of 256 (MXU M granularity), sized from the actual B so
      padding stays well under one tile's worth; capped at 2048 rows.
    """
    if B <= 768:
        return _round_up(B, 8)                       # single tile, minimal padding
    n_tiles = max(2, _cdiv(B, tile_max))
    return min(tile_max, _round_up(_cdiv(B, n_tiles), 256))


def critic_kernel(x_ref, w1_ref, b1_ref, w2_ref, b2_ref, o_ref):
    # x_ref:  [TILE_B, 768] f32     w1_ref: [768, 512] bf16   b1_ref: [1, 512] f32
    # w2_ref: [1, 512] f32 (W2^T)   b2_ref: [1, 1] f32         o_ref: [TILE_B, 1] f32
    x = x_ref[...].astype(jnp.bfloat16)              # VPU cast, hidden under the MXU
    h = jnp.dot(x, w1_ref[...], preferred_element_type=jnp.float32)  # MXU, f32 acc
    h = jnp.maximum(h + b1_ref[...], 0.0)            # bias + ReLU in f32 (VPU)
    # TODO(synk): Dropout is identity here (eval mode); training-mode dropout
    # would use pltpu.prng_seed + pltpu.prng_random_bits to build a mask.
    # Second layer off the MXU: per-lane multiply (VPU) + lane reduce (XLU),
    # h stays f32 -> no bf16 rounding of the hidden activations.
    out = jnp.sum(h * w2_ref[...], axis=-1, keepdims=True)           # [TILE_B, 1]
    o_ref[...] = out + b2_ref[...]


def prepare_params(w1, b1, w2, b2):
    """One-time packing of PyTorch-layout params for the kernel.

    w1: [768, 512], b1: [512] or [1, 512], w2: [512, 1], b2: [1] or [1, 1].
    Returns (w1_bf16 [768,512], b1_f32 [1,512], w2_row_f32 [1,512], b2_f32 [1,1]).
    """
    w1b = w1.astype(jnp.bfloat16)
    b1f = jnp.asarray(b1, jnp.float32).reshape(1, HID_DIM)
    w2row = jnp.asarray(w2, jnp.float32).reshape(HID_DIM, OUT_DIM).T  # [1, 512]
    b2f = jnp.asarray(b2, jnp.float32).reshape(1, OUT_DIM)
    return w1b, b1f, w2row, b2f


def critic_forward(state, w1b, b1f, w2row, b2f, *, tile_b=None):
    """state: [B, 768] float32 -> value: [B] float32 (squeezed like torch)."""
    B = state.shape[0]
    if tile_b is None:
        tile_b = _choose_tile_b(B)
    b_pad = _round_up(B, tile_b)
    if b_pad != B:
        state = jnp.pad(state, ((0, b_pad - B), (0, 0)))
    state = state.astype(jnp.float32)

    n_tiles = b_pad // tile_b
    cost = pl.CostEstimate(
        flops=2 * b_pad * IN_DIM * HID_DIM + 2 * b_pad * HID_DIM,
        transcendentals=0,
        bytes_accessed=(b_pad * IN_DIM * 4            # x (f32)
                        + IN_DIM * HID_DIM * 2        # W1 (bf16)
                        + HID_DIM * 4 * 2             # b1 + w2 row
                        + b_pad * 4),                 # output
    )

    out = pl.pallas_call(
        critic_kernel,
        out_shape=jax.ShapeDtypeStruct((b_pad, OUT_DIM), jnp.float32),
        grid_spec=pl.GridSpec(
            grid=(n_tiles,),
            in_specs=[
                pl.BlockSpec((tile_b, IN_DIM), lambda i: (i, 0)),     # x: tiled over batch
                pl.BlockSpec((IN_DIM, HID_DIM), lambda i: (0, 0)),    # W1: resident
                pl.BlockSpec((1, HID_DIM), lambda i: (0, 0)),         # b1: resident
                pl.BlockSpec((1, HID_DIM), lambda i: (0, 0)),         # W2^T row: resident
                pl.BlockSpec((1, OUT_DIM), lambda i: (0, 0)),         # b2: resident
            ],
            out_specs=pl.BlockSpec((tile_b, OUT_DIM), lambda i: (i, 0)),
        ),
        compiler_params=pltpu.CompilerParams(
            dimension_semantics=("parallel",),        # shard batch tiles across TCs (v7x)
            vmem_limit_bytes=32 * 1024 * 1024,        # safe on v5e/v6e/v7x for tile_b<=2048
        ),
        cost_estimate=cost,
    )(state, w1b, b1f, w2row, b2f)

    # slice off batch padding, then squeeze() like the PyTorch module
    return jnp.squeeze(out[:B])


def init_params():
    """Deterministic init mimicking torch.nn.Linear default (uniform +-1/sqrt(fan_in))."""
    k = jax.random.PRNGKey(0)
    k1, k2, k3, k4 = jax.random.split(k, 4)
    bound1 = 1.0 / jnp.sqrt(jnp.float32(IN_DIM))
    bound2 = 1.0 / jnp.sqrt(jnp.float32(HID_DIM))
    w1 = jax.random.uniform(k1, (IN_DIM, HID_DIM), jnp.float32, -bound1, bound1)
    b1 = jax.random.uniform(k2, (HID_DIM,), jnp.float32, -bound1, bound1)
    w2 = jax.random.uniform(k3, (HID_DIM, OUT_DIM), jnp.float32, -bound2, bound2)
    b2 = jax.random.uniform(k4, (OUT_DIM,), jnp.float32, -bound2, bound2)
    return w1, b1, w2, b2


def _reference(state, w1, b1, w2, b2):
    h = jnp.maximum(state @ w1 + b1[None, :], 0.0)
    return jnp.squeeze(h @ w2 + b2[None, :])


if __name__ == "__main__":
    key = jax.random.PRNGKey(0)
    w1, b1, w2, b2 = init_params()
    # Weight packing / bf16 cast happens ONCE, outside the per-call hot path.
    params = prepare_params(w1, b1, w2, b2)

    # Case 1: small batch, multiple of 8.
    B = 8
    state = jax.random.normal(jax.random.fold_in(key, 123), (B, IN_DIM), jnp.float32)
    value = jax.block_until_ready(critic_forward(state, *params))
    ref = _reference(state, w1, b1, w2, b2)
    assert value.shape == (B,), value.shape
    # x / W1 go through bf16 for the MXU -> loosened tolerance vs f32 reference
    # (intentional precision tradeoff; second layer stays f32).
    assert jnp.allclose(value, ref, atol=2e-2, rtol=2e-2), (value, ref)

    # Case 2: ragged batch (exercises the padding path).
    B2 = 5
    state2 = jax.random.normal(jax.random.fold_in(key, 456), (B2, IN_DIM), jnp.float32)
    value2 = jax.block_until_ready(critic_forward(state2, *params))
    ref2 = _reference(state2, w1, b1, w2, b2)
    assert value2.shape == (B2,), value2.shape
    assert jnp.allclose(value2, ref2, atol=2e-2, rtol=2e-2), (value2, ref2)

    print("KERNEL_OK")
</pallas_src>

<mosaic_0001>
module attributes {stable_mosaic.version = 11 : i64} {
  func.func @critic_kernel(%arg0: i32, %arg1: memref<8x768xf32, #tpu.memory_space<vmem>>, %arg2: memref<768x512xbf16, #tpu.memory_space<vmem>>, %arg3: memref<1x512xf32, #tpu.memory_space<vmem>>, %arg4: memref<1x512xf32, #tpu.memory_space<vmem>>, %arg5: memref<1x1xf32, #tpu.memory_space<vmem>>, %arg6: memref<8x1xf32, #tpu.memory_space<vmem>>) attributes {dimension_semantics = [#tpu.dimension_semantics<parallel>], iteration_bounds = array<i64: 1>, scalar_prefetch = 0 : i64, scratch_operands = 0 : i64, tpu.core_type = #tpu.core_type<tc>, window_params = [{transform_indices = @transform_0, window_bounds = array<i64: 8, 768>}, {pipeline_mode = #tpu.pipeline_mode<synchronous>, transform_indices = @transform_1, window_bounds = array<i64: 768, 512>}, {pipeline_mode = #tpu.pipeline_mode<synchronous>, transform_indices = @transform_2, window_bounds = array<i64: 1, 512>}, {pipeline_mode = #tpu.pipeline_mode<synchronous>, transform_indices = @transform_3, window_bounds = array<i64: 1, 512>}, {pipeline_mode = #tpu.pipeline_mode<synchronous>, transform_indices = @transform_4, window_bounds = array<i64: 1, 1>}, {transform_indices = @transform_5, window_bounds = array<i64: 8, 1>}]} {
    %c0 = arith.constant 0 : index
    %c0_0 = arith.constant 0 : index
    %0 = vector.load %arg1[%c0, %c0_0] : memref<8x768xf32, #tpu.memory_space<vmem>>, vector<8x768xf32>
    %1 = arith.truncf %0 : vector<8x768xf32> to vector<8x768xbf16>
    %c0_1 = arith.constant 0 : index
    %c0_2 = arith.constant 0 : index
    %2 = vector.load %arg2[%c0_1, %c0_2] : memref<768x512xbf16, #tpu.memory_space<vmem>>, vector<768x512xbf16>
    %cst = arith.constant dense<0.000000e+00> : vector<8x512xf32>
    %3 = tpu.matmul %1, %2, %cst {dimension_numbers = #tpu.dot_dimension_numbers<[1], [0], [0], [1], [0, 0, 1, 1], [], []>} : vector<8x768xbf16>, vector<768x512xbf16>, vector<8x512xf32> -> vector<8x512xf32>
    %c0_3 = arith.constant 0 : index
    %c0_4 = arith.constant 0 : index
    %4 = vector.load %arg3[%c0_3, %c0_4] : memref<1x512xf32, #tpu.memory_space<vmem>>, vector<1x512xf32>
    %5 = vector.broadcast %4 : vector<1x512xf32> to vector<8x512xf32>
    %6 = arith.addf %3, %5 : vector<8x512xf32>
    %cst_5 = arith.constant 0.000000e+00 : f32
    %7 = vector.broadcast %cst_5 : f32 to vector<8x512xf32>
    %8 = arith.maximumf %6, %7 : vector<8x512xf32>
    %c0_6 = arith.constant 0 : index
    %c0_7 = arith.constant 0 : index
    %9 = vector.load %arg4[%c0_6, %c0_7] : memref<1x512xf32, #tpu.memory_space<vmem>>, vector<1x512xf32>
    %10 = vector.broadcast %9 : vector<1x512xf32> to vector<8x512xf32>
    %11 = arith.mulf %8, %10 : vector<8x512xf32>
    %cst_8 = arith.constant dense<0.000000e+00> : vector<8xf32>
    %12 = vector.multi_reduction <add>, %11, %cst_8 [1] : vector<8x512xf32> to vector<8xf32>
    %13 = vector.shape_cast %12 : vector<8xf32> to vector<8x1xf32>
    %c0_9 = arith.constant 0 : index
    %c0_10 = arith.constant 0 : index
    %14 = vector.load %arg5[%c0_9, %c0_10] : memref<1x1xf32, #tpu.memory_space<vmem>>, vector<1x1xf32>
    %15 = vector.broadcast %14 : vector<1x1xf32> to vector<8x1xf32>
    %16 = arith.addf %13, %15 : vector<8x1xf32>
    %c0_11 = arith.constant 0 : index
    %c0_12 = arith.constant 0 : index
    %17 = vector.load %arg6[%c0_11, %c0_12] : memref<8x1xf32, #tpu.memory_space<vmem>>, vector<8x1xf32>
    tpu.vector_store %arg6[%c0_11, %c0_12], %16 {strides = array<i32>} : memref<8x1xf32, #tpu.memory_space<vmem>>, vector<8x1xf32>,
    return
  }
  func.func @transform_0(%arg0: i32) -> (i32, i32) {
    %c0_i32 = arith.constant 0 : i32
    %c0_i32_0 = arith.constant 0 : i32
    return %arg0, %c0_i32 : i32, i32
  }
  func.func @transform_1(%arg0: i32) -> (i32, i32) {
    %c0_i32 = arith.constant 0 : i32
    %c0_i32_0 = arith.constant 0 : i32
    %c0_i32_1 = arith.constant 0 : i32
    return %c0_i32, %c0_i32_0 : i32, i32
  }
  func.func @transform_2(%arg0: i32) -> (i32, i32) {
    %c0_i32 = arith.constant 0 : i32
    %c0_i32_0 = arith.constant 0 : i32
    %c0_i32_1 = arith.constant 0 : i32
    return %c0_i32, %c0_i32_0 : i32, i32
  }
  func.func @transform_3(%arg0: i32) -> (i32, i32) {
    %c0_i32 = arith.constant 0 : i32
    %c0_i32_0 = arith.constant 0 : i32
    %c0_i32_1 = arith.constant 0 : i32
    return %c0_i32, %c0_i32_0 : i32, i32
  }
  func.func @transform_4(%arg0: i32) -> (i32, i32) {
    %c0_i32 = arith.constant 0 : i32
    %c0_i32_0 = arith.constant 0 : i32
    %c0_i32_1 = arith.constant 0 : i32
    return %c0_i32, %c0_i32_0 : i32, i32
  }
  func.func @transform_5(%arg0: i32) -> (i32, i32) {
    %c0_i32 = arith.constant 0 : i32
    %c0_i32_0 = arith.constant 0 : i32
    return %arg0, %c0_i32 : i32, i32
  }
}

</mosaic_0001>

<llo_original>
// kernel: tpu_custom_call.1
$region0: #{tpu_custom_call.1}
  #allocation0 [shape = 'u32[]', space=smem, size = 0x4, offset = 0x4, fixed_abs, tag = 'smem constant byte address 0x4 - core index']
  #allocation1 [shape = 'u32[144,128]{1,0:T(1,128)}', space=vmem, size = 0x12000, scoped, tag = 'internal scratch']
  #allocation2 [shape = 'f32[1,1]{1,0:T(1,128)S(1)}', space=vmem, size = 0x200, scoped, tag = 'scoped memory for tpu_custom_call.1']
  %s0 = inlined_call_operand.hbm [shape: f32[8,768], index: 0, kind: input, shape index: {}]
  %s1 = inlined_call_operand.hbm [shape: bf16[768,512], index: 1, kind: input, shape index: {}]
  %s2 = inlined_call_operand.vmem [shape: f32[1,512], index: 2, kind: input, shape index: {}]
  %s3 = inlined_call_operand.vmem [shape: f32[1,512], index: 3, kind: input, shape index: {}]
  %s4 = inlined_call_operand.<no memory space> [shape: f32[1,1], index: 4, kind: input, shape index: {}]
  %s5 = inlined_call_operand.vmem [shape: f32[8,1], index: 5, kind: output, shape index: {}]
  %s6 = sld [smem:[#allocation0]]
  $region38: #{tpu_custom_call.1} parent=0
    _
  %s8 = ssub.s32 1, %s6
  %s9 = scalar_select 0, %s8, %s6
  %v10 = vstv %s4
  %11 = vst [vmem:[#allocation2] sm:$0x1] %v10
  $region1: #{tpu_custom_call.1} parent=0
    #allocation3 [shape = 'u8[24576]{0}', space=vmem, size = 0x6000, scoped, tag = 'input window, operand 0, single buffered']
    #allocation4 [shape = 's32[1]{0}', space=sflag, size = 0x4, scoped, tag = 'scoped memory for tpu_custom_call.1']
    #allocation5 [shape = 'u8[786432]{0}', space=vmem, size = 0xc0000, scoped, tag = 'input window, operand 1, single buffered']
    #allocation6 [shape = 's32[1]{0}', space=sflag, size = 0x4, scoped, tag = 'scoped memory for tpu_custom_call.1']
    %12 = vsyncpa [#allocation4], 0
    %13 = vsyncpa [#allocation6], 0
    // Predicated region
    $region2: #{tpu_custom_call.1} parent=1 // pred_check
      _
    $region3: #{tpu_custom_call.1} parent=1 // pred_check_branch
      %15 = sbr.rel (0) target = $region5
    $region4: #{tpu_custom_call.1} parent=1 // pred_region
      %s17 = ssub.s32 768, 768
      %18 = vsyncadd [#allocation4], %s17
      %s20 = sshll.u32 [#allocation3], 4
      %s21 = int_to_ptr.vmem [resolvable:$true] %s20
      %23 = dma.hbm_to_vmem [thread:$0]  %s0, 768, %s21, [#allocation4]
    $region5: #{tpu_custom_call.1} parent=1 // pred_fallthru
      _
    // Predicated region
    $region6: #{tpu_custom_call.1} parent=1 // pred_check
      _
    $region7: #{tpu_custom_call.1} parent=1 // pred_check_branch
      %25 = sbr.rel (0) target = $region9
    $region8: #{tpu_custom_call.1} parent=1 // pred_region
      %s27 = ssub.s32 24576, 24576
      %28 = vsyncadd [#allocation6], %s27
      %s29 = sshll.u32 [#allocation5], 4
      %s30 = int_to_ptr.vmem [resolvable:$true] %s29
      %35 = dma.hbm_to_vmem [thread:$0]  %s1, 24576, %s30, [#allocation6], 256, 256, 16
    $region9: #{tpu_custom_call.1} parent=1 // pred_fallthru
      _
    // Predicated region
    $region10: #{tpu_custom_call.1} parent=1 // pred_check
      _
    $region11: #{tpu_custom_call.1} parent=1 // pred_check_branch
      %37 = sbr.rel (0) target = $region13
    $region12: #{tpu_custom_call.1} parent=1 // pred_region
      _
    $region13: #{tpu_custom_call.1} parent=1 // pred_fallthru
      _
    // Predicated region
    $region14: #{tpu_custom_call.1} parent=1 // pred_check
      _
    $region15: #{tpu_custom_call.1} parent=1 // pred_check_branch
      %39 = sbr.rel (0) target = $region17
    $region16: #{tpu_custom_call.1} parent=1 // pred_region
      _
    $region17: #{tpu_custom_call.1} parent=1 // pred_fallthru
      _
    // Predicated region
    $region18: #{tpu_custom_call.1} parent=1 // pred_check
      _
    $region19: #{tpu_custom_call.1} parent=1 // pred_check_branch
      %41 = sbr.rel (0) target = $region21
    $region20: #{tpu_custom_call.1} parent=1 // pred_region
      _
    $region21: #{tpu_custom_call.1} parent=1 // pred_fallthru
      _
    // Predicated region
    $region22: #{tpu_custom_call.1} parent=1 // pred_check
      _
    $region23: #{tpu_custom_call.1} parent=1 // pred_check_branch
      %43 = sbr.rel (0) target = $region25
    $region24: #{tpu_custom_call.1} parent=1 // pred_region
      %44 = dma.done [#allocation4], 768
    $region25: #{tpu_custom_call.1} parent=1 // pred_fallthru
      _
    // Predicated region
    $region26: #{tpu_custom_call.1} parent=1 // pred_check
      _
    $region27: #{tpu_custom_call.1} parent=1 // pred_check_branch
      %46 = sbr.rel (0) target = $region29
    $region28: #{tpu_custom_call.1} parent=1 // pred_region
      %47 = dma.done [#allocation6], 24576
    $region29: #{tpu_custom_call.1} parent=1 // pred_fallthru
      _
    %v48 = vld [vmem:[#allocation3] sm:$0xff]
    %v49 = vld [vmem:[#allocation3 + $0x8] sm:$0xff]
    %v50 = vld [vmem:[#allocation3 + $0x10] sm:$0xff]
    %v51 = vld [vmem:[#allocation3 + $0x18] sm:$0xff]
    %v52 = vld [vmem:[#allocation3 + $0x20] sm:$0xff]
    %v53 = vld [vmem:[#allocation3 + $0x28] sm:$0xff]
    %v54 = vpack.c.bf16 %v48, %v48
    %v55 = vpack.c.bf16 %v49, %v49
    %v56 = vpack.c.bf16 %v50, %v50
    %v57 = vpack.c.bf16 %v51, %v51
    %v58 = vpack.c.bf16 %v52, %v52
    %v59 = vpack.c.bf16 %v53, %v53
    %v60 = vld [vmem:[#allocation5] sm:$0xff]
    %v61 = vld [vmem:[#allocation5 + $0x8] sm:$0xff]
    %v62 = vld [vmem:[#allocation5 + $0x10] sm:$0xff]
    %v63 = vld [vmem:[#allocation5 + $0x18] sm:$0xff]
    %v64 = vld [vmem:[#allocation5 + $0x20] sm:$0xff]
    %v65 = vld [vmem:[#allocation5 + $0x28] sm:$0xff]
    %v66 = vld [vmem:[#allocation5 + $0x30] sm:$0xff]
    %v67 = vld [vmem:[#allocation5 + $0x38] sm:$0xff]
    %v68 = vld [vmem:[#allocation5 + $0x40] sm:$0xff]
    %v69 = vld [vmem:[#allocation5 + $0x48] sm:$0xff]
    %v70 = vld [vmem:[#allocation5 + $0x50] sm:$0xff]
    %v71 = vld [vmem:[#allocation5 + $0x58] sm:$0xff]
    %v72 = vld [vmem:[#allocation5 + $0x60] sm:$0xff]
    %v73 = vld [vmem:[#allocation5 + $0x68] sm:$0xff]
    %v74 = vld [vmem:[#allocation5 + $0x70] sm:$0xff]
    %v75 = vld [vmem:[#allocation5 + $0x78] sm:$0xff]
    %v76 = vld [vmem:[#allocation5 + $0x80] sm:$0xff]
    %v77 = vld [vmem:[#allocation5 + $0x88] sm:$0xff]
    %v78 = vld [vmem:[#allocation5 + $0x90] sm:$0xff]
    %v79 = vld [vmem:[#allocation5 + $0x98] sm:$0xff]
    %v80 = vld [vmem:[#allocation5 + $0xa0] sm:$0xff]
    %v81 = vld [vmem:[#allocation5 + $0xa8] sm:$0xff]
    %v82 = vld [vmem:[#allocation5 + $0xb0] sm:$0xff]
    %v83 = vld [vmem:[#allocation5 + $0xb8] sm:$0xff]
    %v84 = vld [vmem:[#allocation5 + $0xc0] sm:$0xff]
    %v85 = vld [vmem:[#allocation5 + $0xc8] sm:$0xff]
    %v86 = vld [vmem:[#allocation5 + $0xd0] sm:$0xff]
    %v87 = vld [vmem:[#allocation5 + $0xd8] sm:$0xff]
    %v88 = vld [vmem:[#allocation5 + $0xe0] sm:$0xff]
    %v89 = vld [vmem:[#allocation5 + $0xe8] sm:$0xff]
    %v90 = vld [vmem:[#allocation5 + $0xf0] sm:$0xff]
    %v91 = vld [vmem:[#allocation5 + $0xf8] sm:$0xff]
    %v92 = vld [vmem:[#allocation5 + $0x100] sm:$0xff]
    %v93 = vld [vmem:[#allocation5 + $0x108] sm:$0xff]
    %v94 = vld [vmem:[#allocation5 + $0x110] sm:$0xff]
    %v95 = vld [vmem:[#allocation5 + $0x118] sm:$0xff]
    %v96 = vld [vmem:[#allocation5 + $0x120] sm:$0xff]
    %v97 = vld [vmem:[#allocation5 + $0x128] sm:$0xff]
    %v98 = vld [vmem:[#allocation5 + $0x130] sm:$0xff]
    %v99 = vld [vmem:[#allocation5 + $0x138] sm:$0xff]
    %v100 = vld [vmem:[#allocation5 + $0x140] sm:$0xff]
    %v101 = vld [vmem:[#allocation5 + $0x148] sm:$0xff]
    %v102 = vld [vmem:[#allocation5 + $0x150] sm:$0xff]
    %v103 = vld [vmem:[#allocation5 + $0x158] sm:$0xff]
    %v104 = vld [vmem:[#allocation5 + $0x160] sm:$0xff]
    %v105 = vld [vmem:[#allocation5 + $0x168] sm:$0xff]
    %v106 = vld [vmem:[#allocation5 + $0x170] sm:$0xff]
    %v107 = vld [vmem:[#allocation5 + $0x178] sm:$0xff]
    %v108 = vld [vmem:[#allocation5 + $0x180] sm:$0xff]
    %v109 = vld [vmem:[#allocation5 + $0x188] sm:$0xff]
    %v110 = vld [vmem:[#allocation5 + $0x190] sm:$0xff]
    %v111 = vld [vmem:[#allocation5 + $0x198] sm:$0xff]
    %v112 = vld [vmem:[#allocation5 + $0x1a0] sm:$0xff]
    %v113 = vld [vmem:[#allocation5 + $0x1a8] sm:$0xff]
    %v114 = vld [vmem:[#allocation5 + $0x1b0] sm:$0xff]
    %v115 = vld [vmem:[#allocation5 + $0x1b8] sm:$0xff]
    %v116 = vld [vmem:[#allocation5 + $0x1c0] sm:$0xff]
    %v117 = vld [vmem:[#allocation5 + $0x1c8] sm:$0xff]
    %v118 = vld [vmem:[#allocation5 + $0x1d0] sm:$0xff]
    %v119 = vld [vmem:[#allocation5 + $0x1d8] sm:$0xff]
    %v120 = vld [vmem:[#allocation5 + $0x1e0] sm:$0xff]
    %v121 = vld [vmem:[#allocation5 + $0x1e8] sm:$0xff]
    %v122 = vld [vmem:[#allocation5 + $0x1f0] sm:$0xff]
    %v123 = vld [vmem:[#allocation5 + $0x1f8] sm:$0xff]
    %v124 = vld [vmem:[#allocation5 + $0x200] sm:$0xff]
    %v125 = vld [vmem:[#allocation5 + $0x208] sm:$0xff]
    %v126 = vld [vmem:[#allocation5 + $0x210] sm:$0xff]
    %v127 = vld [vmem:[#allocation5 + $0x218] sm:$0xff]
    %v128 = vld [vmem:[#allocation5 + $0x220] sm:$0xff]
    %v129 = vld [vmem:[#allocation5 + $0x228] sm:$0xff]
    %v130 = vld [vmem:[#allocation5 + $0x230] sm:$0xff]
    %v131 = vld [vmem:[#allocation5 + $0x238] sm:$0xff]
    %v132 = vld [vmem:[#allocation5 + $0x240] sm:$0xff]
    %v133 = vld [vmem:[#allocation5 + $0x248] sm:$0xff]
    %v134 = vld [vmem:[#allocation5 + $0x250] sm:$0xff]
    %v135 = vld [vmem:[#allocation5 + $0x258] sm:$0xff]
    %v136 = vld [vmem:[#allocation5 + $0x260] sm:$0xff]
    %v137 = vld [vmem:[#allocation5 + $0x268] sm:$0xff]
    %v138 = vld [vmem:[#allocation5 + $0x270] sm:$0xff]
    %v139 = vld [vmem:[#allocation5 + $0x278] sm:$0xff]
    %v140 = vld [vmem:[#allocation5 + $0x280] sm:$0xff]
    %v141 = vld [vmem:[#allocation5 + $0x288] sm:$0xff]
    %v142 = vld [vmem:[#allocation5 + $0x290] sm:$0xff]
    %v143 = vld [vmem:[#allocation5 + $0x298] sm:$0xff]
    %v144 = vld [vmem:[#allocation5 + $0x2a0] sm:$0xff]
    %v145 = vld [vmem:[#allocation5 + $0x2a8] sm:$0xff]
    %v146 = vld [vmem:[#allocation5 + $0x2b0] sm:$0xff]
    %v147 = vld [vmem:[#allocation5 + $0x2b8] sm:$0xff]
    %v148 = vld [vmem:[#allocation5 + $0x2c0] sm:$0xff]
    %v149 = vld [vmem:[#allocation5 + $0x2c8] sm:$0xff]
    %v150 = vld [vmem:[#allocation5 + $0x2d0] sm:$0xff]
    %v151 = vld [vmem:[#allocation5 + $0x2d8] sm:$0xff]
    %v152 = vld [vmem:[#allocation5 + $0x2e0] sm:$0xff]
    %v153 = vld [vmem:[#allocation5 + $0x2e8] sm:$0xff]
    %v154 = vld [vmem:[#allocation5 + $0x2f0] sm:$0xff]
    %v155 = vld [vmem:[#allocation5 + $0x2f8] sm:$0xff]
    %v156 = vld [vmem:[#allocation5 + $0x300] sm:$0xff]
    %v157 = vld [vmem:[#allocation5 + $0x308] sm:$0xff]
    %v158 = vld [vmem:[#allocation5 + $0x310] sm:$0xff]
    %v159 = vld [vmem:[#allocation5 + $0x318] sm:$0xff]
    %v160 = vld [vmem:[#allocation5 + $0x320] sm:$0xff]
    %v161 = vld [vmem:[#allocation5 + $0x328] sm:$0xff]
    %v162 = vld [vmem:[#allocation5 + $0x330] sm:$0xff]
    %v163 = vld [vmem:[#allocation5 + $0x338] sm:$0xff]
    %v164 = vld [vmem:[#allocation5 + $0x340] sm:$0xff]
    %v165 = vld [vmem:[#allocation5 + $0x348] sm:$0xff]
    %v166 = vld [vmem:[#allocation5 + $0x350] sm:$0xff]
    %v167 = vld [vmem:[#allocation5 + $0x358] sm:$0xff]
    %v168 = vld [vmem:[#allocation5 + $0x360] sm:$0xff]
    %v169 = vld [vmem:[#allocation5 + $0x368] sm:$0xff]
    %v170 = vld [vmem:[#allocation5 + $0x370] sm:$0xff]
    %v171 = vld [vmem:[#allocation5 + $0x378] sm:$0xff]
    %v172 = vld [vmem:[#allocation5 + $0x380] sm:$0xff]
    %v173 = vld [vmem:[#allocation5 + $0x388] sm:$0xff]
    %v174 = vld [vmem:[#allocation5 + $0x390] sm:$0xff]
    %v175 = vld [vmem:[#allocation5 + $0x398] sm:$0xff]
    %v176 = vld [vmem:[#allocation5 + $0x3a0] sm:$0xff]
    %v177 = vld [vmem:[#allocation5 + $0x3a8] sm:$0xff]
    %v178 = vld [vmem:[#allocation5 + $0x3b0] sm:$0xff]
    %v179 = vld [vmem:[#allocation5 + $0x3b8] sm:$0xff]
    %v180 = vld [vmem:[#allocation5 + $0x3c0] sm:$0xff]
    %v181 = vld [vmem:[#allocation5 + $0x3c8] sm:$0xff]
    %v182 = vld [vmem:[#allocation5 + $0x3d0] sm:$0xff]
    %v183 = vld [vmem:[#allocation5 + $0x3d8] sm:$0xff]
    %v184 = vld [vmem:[#allocation5 + $0x3e0] sm:$0xff]
    %v185 = vld [vmem:[#allocation5 + $0x3e8] sm:$0xff]
    %v186 = vld [vmem:[#allocation5 + $0x3f0] sm:$0xff]
    %v187 = vld [vmem:[#allocation5 + $0x3f8] sm:$0xff]
    %v188 = vld [vmem:[#allocation5 + $0x400] sm:$0xff]
    %v189 = vld [vmem:[#allocation5 + $0x408] sm:$0xff]
    %v190 = vld [vmem:[#allocation5 + $0x410] sm:$0xff]
    %v191 = vld [vmem:[#allocation5 + $0x418] sm:$0xff]
    %v192 = vld [vmem:[#allocation5 + $0x420] sm:$0xff]
    %v193 = vld [vmem:[#allocation5 + $0x428] sm:$0xff]
    %v194 = vld [vmem:[#allocation5 + $0x430] sm:$0xff]
    %v195 = vld [vmem:[#allocation5 + $0x438] sm:$0xff]
    %v196 = vld [vmem:[#allocation5 + $0x440] sm:$0xff]
    %v197 = vld [vmem:[#allocation5 + $0x448] sm:$0xff]
    %v198 = vld [vmem:[#allocation5 + $0x450] sm:$0xff]
    %v199 = vld [vmem:[#allocation5 + $0x458] sm:$0xff]
    %v200 = vld [vmem:[#allocation5 + $0x460] sm:$0xff]
    %v201 = vld [vmem:[#allocation5 + $0x468] sm:$0xff]
    %v202 = vld [vmem:[#allocation5 + $0x470] sm:$0xff]
    %v203 = vld [vmem:[#allocation5 + $0x478] sm:$0xff]
    %v204 = vld [vmem:[#allocation5 + $0x480] sm:$0xff]
    %v205 = vld [vmem:[#allocation5 + $0x488] sm:$0xff]
    %v206 = vld [vmem:[#allocation5 + $0x490] sm:$0xff]
    %v207 = vld [vmem:[#allocation5 + $0x498] sm:$0xff]
    %v208 = vld [vmem:[#allocation5 + $0x4a0] sm:$0xff]
    %v209 = vld [vmem:[#allocation5 + $0x4a8] sm:$0xff]
    %v210 = vld [vmem:[#allocation5 + $0x4b0] sm:$0xff]
    %v211 = vld [vmem:[#allocation5 + $0x4b8] sm:$0xff]
    %v212 = vld [vmem:[#allocation5 + $0x4c0] sm:$0xff]
    %v213 = vld [vmem:[#allocation5 + $0x4c8] sm:$0xff]
    %v214 = vld [vmem:[#allocation5 + $0x4d0] sm:$0xff]
    %v215 = vld [vmem:[#allocation5 + $0x4d8] sm:$0xff]
    %v216 = vld [vmem:[#allocation5 + $0x4e0] sm:$0xff]
    %v217 = vld [vmem:[#allocation5 + $0x4e8] sm:$0xff]
    %v218 = vld [vmem:[#allocation5 + $0x4f0] sm:$0xff]
    %v219 = vld [vmem:[#allocation5 + $0x4f8] sm:$0xff]
    %v220 = vld [vmem:[#allocation5 + $0x500] sm:$0xff]
    %v221 = vld [vmem:[#allocation5 + $0x508] sm:$0xff]
    %v222 = vld [vmem:[#allocation5 + $0x510] sm:$0xff]
    %v223 = vld [vmem:[#allocation5 + $0x518] sm:$0xff]
    %v224 = vld [vmem:[#allocation5 + $0x520] sm:$0xff]
    %v225 = vld [vmem:[#allocation5 + $0x528] sm:$0xff]
    %v226 = vld [vmem:[#allocation5 + $0x530] sm:$0xff]
    %v227 = vld [vmem:[#allocation5 + $0x538] sm:$0xff]
    %v228 = vld [vmem:[#allocation5 + $0x540] sm:$0xff]
    %v229 = vld [vmem:[#allocation5 + $0x548] sm:$0xff]
    %v230 = vld [vmem:[#allocation5 + $0x550] sm:$0xff]
    %v231 = vld [vmem:[#allocation5 + $0x558] sm:$0xff]
    %v232 = vld [vmem:[#allocation5 + $0x560] sm:$0xff]
    %v233 = vld [vmem:[#allocation5 + $0x568] sm:$0xff]
    %v234 = vld [vmem:[#allocation5 + $0x570] sm:$0xff]
    %v235 = vld [vmem:[#allocation5 + $0x578] sm:$0xff]
    %v236 = vld [vmem:[#allocation5 + $0x580] sm:$0xff]
    %v237 = vld [vmem:[#allocation5 + $0x588] sm:$0xff]
    %v238 = vld [vmem:[#allocation5 + $0x590] sm:$0xff]
    %v239 = vld [vmem:[#allocation5 + $0x598] sm:$0xff]
    %v240 = vld [vmem:[#allocation5 + $0x5a0] sm:$0xff]
    %v241 = vld [vmem:[#allocation5 + $0x5a8] sm:$0xff]
    %v242 = vld [vmem:[#allocation5 + $0x5b0] sm:$0xff]
    %v243 = vld [vmem:[#allocation5 + $0x5b8] sm:$0xff]
    %v244 = vld [vmem:[#allocation5 + $0x5c0] sm:$0xff]
    %v245 = vld [vmem:[#allocation5 + $0x5c8] sm:$0xff]
    %v246 = vld [vmem:[#allocation5 + $0x5d0] sm:$0xff]
    %v247 = vld [vmem:[#allocation5 + $0x5d8] sm:$0xff]
    %v248 = vld [vmem:[#allocation5 + $0x5e0] sm:$0xff]
    %v249 = vld [vmem:[#allocation5 + $0x5e8] sm:$0xff]
    %v250 = vld [vmem:[#allocation5 + $0x5f0] sm:$0xff]
    %v251 = vld [vmem:[#allocation5 + $0x5f8] sm:$0xff]
    %v252 = vld [vmem:[%s2] sm:$0xf]
    %v254 = vlaneseq
    %v255 = vshrl.u32 %v254, 7
    %v256 = vsub.s32 0, %v255
    %v257 = vrot.slane %v252, %v256
    %v258 = vlaneseq
    %v259 = vshrl.u32 %v258, 7
    %v260 = vsub.s32 1, %v259
    %v261 = vrot.slane %v252, %v260
    %v262 = vlaneseq
    %v263 = vshrl.u32 %v262, 7
    %v264 = vsub.s32 2, %v263
    %v265 = vrot.slane %v252, %v264
    %v266 = vlaneseq
    %v267 = vshrl.u32 %v266, 7
    %v268 = vsub.s32 3, %v267
    %v269 = vrot.slane %v252, %v268
    %v466 = vunpack.c.l.b16 %v60
    %v467 = vunpack.c.h.b16 %v60
    %v468 = vunpack.c.l.b16 %v61
    %v469 = vunpack.c.h.b16 %v61
    %v470 = vunpack.c.l.b16 %v62
    %v471 = vunpack.c.h.b16 %v62
    %v472 = vunpack.c.l.b16 %v63
    %v473 = vunpack.c.h.b16 %v63
    %v474 = vunpack.c.l.b16 %v64
    %v475 = vunpack.c.h.b16 %v64
    %v476 = vunpack.c.l.b16 %v65
    %v477 = vunpack.c.h.b16 %v65
    %v478 = vunpack.c.l.b16 %v66
    %v479 = vunpack.c.h.b16 %v66
    %v480 = vunpack.c.l.b16 %v67
    %v481 = vunpack.c.h.b16 %v67
    %v482 = vunpack.c.l.b16 %v68
    %v483 = vunpack.c.h.b16 %v68
    %v484 = vunpack.c.l.b16 %v69
    %v485 = vunpack.c.h.b16 %v69
    %v486 = vunpack.c.l.b16 %v70
    %v487 = vunpack.c.h.b16 %v70
    %v488 = vunpack.c.l.b16 %v71
    %v489 = vunpack.c.h.b16 %v71
    %v490 = vunpack.c.l.b16 %v72
    %v491 = vunpack.c.h.b16 %v72
    %v492 = vunpack.c.l.b16 %v73
    %v493 = vunpack.c.h.b16 %v73
    %v494 = vunpack.c.l.b16 %v74
    %v495 = vunpack.c.h.b16 %v74
    %v496 = vunpack.c.l.b16 %v75
    %v497 = vunpack.c.h.b16 %v75
    %v498 = vunpack.c.l.b16 %v76
    %v499 = vunpack.c.h.b16 %v76
    %v500 = vunpack.c.l.b16 %v77
    %v501 = vunpack.c.h.b16 %v77
    %v502 = vunpack.c.l.b16 %v78
    %v503 = vunpack.c.h.b16 %v78
    %v504 = vunpack.c.l.b16 %v79
    %v505 = vunpack.c.h.b16 %v79
    %v506 = vunpack.c.l.b16 %v80
    %v507 = vunpack.c.h.b16 %v80
    %v508 = vunpack.c.l.b16 %v81
    %v509 = vunpack.c.h.b16 %v81
    %v510 = vunpack.c.l.b16 %v82
    %v511 = vunpack.c.h.b16 %v82
    %v512 = vunpack.c.l.b16 %v83
    %v513 = vunpack.c.h.b16 %v83
    %v514 = vunpack.c.l.b16 %v84
    %v515 = vunpack.c.h.b16 %v84
    %v516 = vunpack.c.l.b16 %v85
    %v517 = vunpack.c.h.b16 %v85
    %v518 = vunpack.c.l.b16 %v86
    %v519 = vunpack.c.h.b16 %v86
    %v520 = vunpack.c.l.b16 %v87
    %v521 = vunpack.c.h.b16 %v87
    %v522 = vunpack.c.l.b16 %v88
    %v523 = vunpack.c.h.b16 %v88
    %v524 = vunpack.c.l.b16 %v89
    %v525 = vunpack.c.h.b16 %v89
    %v526 = vunpack.c.l.b16 %v90
    %v527 = vunpack.c.h.b16 %v90
    %v528 = vunpack.c.l.b16 %v91
    %v529 = vunpack.c.h.b16 %v91
    %v530 = vunpack.c.l.b16 %v92
    %v531 = vunpack.c.h.b16 %v92
    %v532 = vunpack.c.l.b16 %v93
    %v533 = vunpack.c.h.b16 %v93
    %v534 = vunpack.c.l.b16 %v94
    %v535 = vunpack.c.h.b16 %v94
    %v536 = vunpack.c.l.b16 %v95
    %v537 = vunpack.c.h.b16 %v95
    %v538 = vunpack.c.l.b16 %v96
    %v539 = vunpack.c.h.b16 %v96
    %v540 = vunpack.c.l.b16 %v97
    %v541 = vunpack.c.h.b16 %v97
    %v542 = vunpack.c.l.b16 %v98
    %v543 = vunpack.c.h.b16 %v98
    %v544 = vunpack.c.l.b16 %v99
    %v545 = vunpack.c.h.b16 %v99
    %v546 = vunpack.c.l.b16 %v100
    %v547 = vunpack.c.h.b16 %v100
    %v548 = vunpack.c.l.b16 %v101
    %v549 = vunpack.c.h.b16 %v101
    %v550 = vunpack.c.l.b16 %v102
    %v551 = vunpack.c.h.b16 %v102
    %v552 = vunpack.c.l.b16 %v103
    %v553 = vunpack.c.h.b16 %v103
    %v554 = vunpack.c.l.b16 %v104
    %v555 = vunpack.c.h.b16 %v104
    %v556 = vunpack.c.l.b16 %v105
    %v557 = vunpack.c.h.b16 %v105
    %v558 = vunpack.c.l.b16 %v106
    %v559 = vunpack.c.h.b16 %v106
    %v560 = vunpack.c.l.b16 %v107
    %v561 = vunpack.c.h.b16 %v107
    %v562 = vunpack.c.l.b16 %v108
    %v563 = vunpack.c.h.b16 %v108
    %v564 = vunpack.c.l.b16 %v109
    %v565 = vunpack.c.h.b16 %v109
    %v566 = vunpack.c.l.b16 %v110
    %v567 = vunpack.c.h.b16 %v110
    %v568 = vunpack.c.l.b16 %v111
    %v569 = vunpack.c.h.b16 %v111
    %v570 = vunpack.c.l.b16 %v112
    %v571 = vunpack.c.h.b16 %v112
    %v572 = vunpack.c.l.b16 %v113
    %v573 = vunpack.c.h.b16 %v113
    %v574 = vunpack.c.l.b16 %v114
    %v575 = vunpack.c.h.b16 %v114
    %v576 = vunpack.c.l.b16 %v115
    %v577 = vunpack.c.h.b16 %v115
    %v578 = vunpack.c.l.b16 %v116
    %v579 = vunpack.c.h.b16 %v116
    %v580 = vunpack.c.l.b16 %v117
    %v581 = vunpack.c.h.b16 %v117
    %v582 = vunpack.c.l.b16 %v118
    %v583 = vunpack.c.h.b16 %v118
    %v584 = vunpack.c.l.b16 %v119
    %v585 = vunpack.c.h.b16 %v119
    %v586 = vunpack.c.l.b16 %v120
    %v587 = vunpack.c.h.b16 %v120
    %v588 = vunpack.c.l.b16 %v121
    %v589 = vunpack.c.h.b16 %v121
    %v590 = vunpack.c.l.b16 %v122
    %v591 = vunpack.c.h.b16 %v122
    %v592 = vunpack.c.l.b16 %v123
    %v593 = vunpack.c.h.b16 %v123
    %v594 = vunpack.c.l.b16 %v124
    %v595 = vunpack.c.h.b16 %v124
    %v596 = vunpack.c.l.b16 %v125
    %v597 = vunpack.c.h.b16 %v125
    %v598 = vunpack.c.l.b16 %v126
    %v599 = vunpack.c.h.b16 %v126
    %v600 = vunpack.c.l.b16 %v127
    %v601 = vunpack.c.h.b16 %v127
    %v602 = vunpack.c.l.b16 %v128
    %v603 = vunpack.c.h.b16 %v128
    %v604 = vunpack.c.l.b16 %v129
    %v605 = vunpack.c.h.b16 %v129
    %v606 = vunpack.c.l.b16 %v130
    %v607 = vunpack.c.h.b16 %v130
    %v608 = vunpack.c.l.b16 %v131
    %v609 = vunpack.c.h.b16 %v131
    %v610 = vunpack.c.l.b16 %v132
    %v611 = vunpack.c.h.b16 %v132
    %v612 = vunpack.c.l.b16 %v133
    %v613 = vunpack.c.h.b16 %v133
    %v614 = vunpack.c.l.b16 %v134
    %v615 = vunpack.c.h.b16 %v134
    %v616 = vunpack.c.l.b16 %v135
    %v617 = vunpack.c.h.b16 %v135
    %v618 = vunpack.c.l.b16 %v136
    %v619 = vunpack.c.h.b16 %v136
    %v620 = vunpack.c.l.b16 %v137
    %v621 = vunpack.c.h.b16 %v137
    %v622 = vunpack.c.l.b16 %v138
    %v623 = vunpack.c.h.b16 %v138
    %v624 = vunpack.c.l.b16 %v139
    %v625 = vunpack.c.h.b16 %v139
    %v626 = vunpack.c.l.b16 %v140
    %v627 = vunpack.c.h.b16 %v140
    %v628 = vunpack.c.l.b16 %v141
    %v629 = vunpack.c.h.b16 %v141
    %v630 = vunpack.c.l.b16 %v142
    %v631 = vunpack.c.h.b16 %v142
    %v632 = vunpack.c.l.b16 %v143
    %v633 = vunpack.c.h.b16 %v143
    %v634 = vunpack.c.l.b16 %v144
    %v635 = vunpack.c.h.b16 %v144
    %v636 = vunpack.c.l.b16 %v145
    %v637 = vunpack.c.h.b16 %v145
    %v638 = vunpack.c.l.b16 %v146
    %v639 = vunpack.c.h.b16 %v146
    %v640 = vunpack.c.l.b16 %v147
    %v641 = vunpack.c.h.b16 %v147
    %v642 = vunpack.c.l.b16 %v148
    %v643 = vunpack.c.h.b16 %v148
    %v644 = vunpack.c.l.b16 %v149
    %v645 = vunpack.c.h.b16 %v149
    %v646 = vunpack.c.l.b16 %v150
    %v647 = vunpack.c.h.b16 %v150
    %v648 = vunpack.c.l.b16 %v151
    %v649 = vunpack.c.h.b16 %v151
    %v650 = vunpack.c.l.b16 %v152
    %v651 = vunpack.c.h.b16 %v152
    %v652 = vunpack.c.l.b16 %v153
    %v653 = vunpack.c.h.b16 %v153
    %v654 = vunpack.c.l.b16 %v154
    %v655 = vunpack.c.h.b16 %v154
    %v656 = vunpack.c.l.b16 %v155
    %v657 = vunpack.c.h.b16 %v155
    %v658 = vunpack.c.l.b16 %v156
    %v659 = vunpack.c.h.b16 %v156
    %v660 = vunpack.c.l.b16 %v157
    %v661 = vunpack.c.h.b16 %v157
    %v662 = vunpack.c.l.b16 %v158
    %v663 = vunpack.c.h.b16 %v158
    %v664 = vunpack.c.l.b16 %v159
    %v665 = vunpack.c.h.b16 %v159
    %v666 = vunpack.c.l.b16 %v160
    %v667 = vunpack.c.h.b16 %v160
    %v668 = vunpack.c.l.b16 %v161
    %v669 = vunpack.c.h.b16 %v161
    %v670 = vunpack.c.l.b16 %v162
    %v671 = vunpack.c.h.b16 %v162
    %v672 = vunpack.c.l.b16 %v163
    %v673 = vunpack.c.h.b16 %v163
    %v674 = vunpack.c.l.b16 %v164
    %v675 = vunpack.c.h.b16 %v164
    %v676 = vunpack.c.l.b16 %v165
    %v677 = vunpack.c.h.b16 %v165
    %v678 = vunpack.c.l.b16 %v166
    %v679 = vunpack.c.h.b16 %v166
    %v680 = vunpack.c.l.b16 %v167
    %v681 = vunpack.c.h.b16 %v167
    %v682 = vunpack.c.l.b16 %v168
    %v683 = vunpack.c.h.b16 %v168
    %v684 = vunpack.c.l.b16 %v169
    %v685 = vunpack.c.h.b16 %v169
    %v686 = vunpack.c.l.b16 %v170
    %v687 = vunpack.c.h.b16 %v170
    %v688 = vunpack.c.l.b16 %v171
    %v689 = vunpack.c.h.b16 %v171
    %v690 = vunpack.c.l.b16 %v172
    %v691 = vunpack.c.h.b16 %v172
    %v692 = vunpack.c.l.b16 %v173
    %v693 = vunpack.c.h.b16 %v173
    %v694 = vunpack.c.l.b16 %v174
    %v695 = vunpack.c.h.b16 %v174
    %v696 = vunpack.c.l.b16 %v175
    %v697 = vunpack.c.h.b16 %v175
    %v698 = vunpack.c.l.b16 %v176
    %v699 = vunpack.c.h.b16 %v176
    %v700 = vunpack.c.l.b16 %v177
    %v701 = vunpack.c.h.b16 %v177
    %v702 = vunpack.c.l.b16 %v178
    %v703 = vunpack.c.h.b16 %v178
    %v704 = vunpack.c.l.b16 %v179
    %v705 = vunpack.c.h.b16 %v179
    %v706 = vunpack.c.l.b16 %v180
    %v707 = vunpack.c.h.b16 %v180
    %v708 = vunpack.c.l.b16 %v181
    %v709 = vunpack.c.h.b16 %v181
    %v710 = vunpack.c.l.b16 %v182
    %v711 = vunpack.c.h.b16 %v182
    %v712 = vunpack.c.l.b16 %v183
    %v713 = vunpack.c.h.b16 %v183
    %v714 = vunpack.c.l.b16 %v184
    %v715 = vunpack.c.h.b16 %v184
    %v716 = vunpack.c.l.b16 %v185
    %v717 = vunpack.c.h.b16 %v185
    %v718 = vunpack.c.l.b16 %v186
    %v719 = vunpack.c.h.b16 %v186
    %v720 = vunpack.c.l.b16 %v187
    %v721 = vunpack.c.h.b16 %v187
    %v722 = vunpack.c.l.b16 %v188
    %v723 = vunpack.c.h.b16 %v188
    %v724 = vunpack.c.l.b16 %v189
    %v725 = vunpack.c.h.b16 %v189
    %v726 = vunpack.c.l.b16 %v190
    %v727 = vunpack.c.h.b16 %v190
    %v728 = vunpack.c.l.b16 %v191
    %v729 = vunpack.c.h.b16 %v191
    %v730 = vunpack.c.l.b16 %v192
    %v731 = vunpack.c.h.b16 %v192
    %v732 = vunpack.c.l.b16 %v193
    %v733 = vunpack.c.h.b16 %v193
    %v734 = vunpack.c.l.b16 %v194
    %v735 = vunpack.c.h.b16 %v194
    %v736 = vunpack.c.l.b16 %v195
    %v737 = vunpack.c.h.b16 %v195
    %v738 = vunpack.c.l.b16 %v196
    %v739 = vunpack.c.h.b16 %v196
    %v740 = vunpack.c.l.b16 %v197
    %v741 = vunpack.c.h.b16 %v197
    %v742 = vunpack.c.l.b16 %v198
    %v743 = vunpack.c.h.b16 %v198
    %v744 = vunpack.c.l.b16 %v199
    %v745 = vunpack.c.h.b16 %v199
    %v746 = vunpack.c.l.b16 %v200
    %v747 = vunpack.c.h.b16 %v200
    %v748 = vunpack.c.l.b16 %v201
    %v749 = vunpack.c.h.b16 %v201
    %v750 = vunpack.c.l.b16 %v202
    %v751 = vunpack.c.h.b16 %v202
    %v752 = vunpack.c.l.b16 %v203
    %v753 = vunpack.c.h.b16 %v203
    %v754 = vunpack.c.l.b16 %v204
    %v755 = vunpack.c.h.b16 %v204
    %v756 = vunpack.c.l.b16 %v205
    %v757 = vunpack.c.h.b16 %v205
    %v758 = vunpack.c.l.b16 %v206
    %v759 = vunpack.c.h.b16 %v206
    %v760 = vunpack.c.l.b16 %v207
    %v761 = vunpack.c.h.b16 %v207
    %v762 = vunpack.c.l.b16 %v208
    %v763 = vunpack.c.h.b16 %v208
    %v764 = vunpack.c.l.b16 %v209
    %v765 = vunpack.c.h.b16 %v209
    %v766 = vunpack.c.l.b16 %v210
    %v767 = vunpack.c.h.b16 %v210
    %v768 = vunpack.c.l.b16 %v211
    %v769 = vunpack.c.h.b16 %v211
    %v770 = vunpack.c.l.b16 %v212
    %v771 = vunpack.c.h.b16 %v212
    %v772 = vunpack.c.l.b16 %v213
    %v773 = vunpack.c.h.b16 %v213
    %v774 = vunpack.c.l.b16 %v214
    %v775 = vunpack.c.h.b16 %v214
    %v776 = vunpack.c.l.b16 %v215
    %v777 = vunpack.c.h.b16 %v215
    %v778 = vunpack.c.l.b16 %v216
    %v779 = vunpack.c.h.b16 %v216
    %v780 = vunpack.c.l.b16 %v217
    %v781 = vunpack.c.h.b16 %v217
    %v782 = vunpack.c.l.b16 %v218
    %v783 = vunpack.c.h.b16 %v218
    %v784 = vunpack.c.l.b16 %v219
    %v785 = vunpack.c.h.b16 %v219
    %v786 = vunpack.c.l.b16 %v220
    %v787 = vunpack.c.h.b16 %v220
    %v788 = vunpack.c.l.b16 %v221
    %v789 = vunpack.c.h.b16 %v221
    %v790 = vunpack.c.l.b16 %v222
    %v791 = vunpack.c.h.b16 %v222
    %v792 = vunpack.c.l.b16 %v223
    %v793 = vunpack.c.h.b16 %v223
    %v794 = vunpack.c.l.b16 %v224
    %v795 = vunpack.c.h.b16 %v224
    %v796 = vunpack.c.l.b16 %v225
    %v797 = vunpack.c.h.b16 %v225
    %v798 = vunpack.c.l.b16 %v226
    %v799 = vunpack.c.h.b16 %v226
    %v800 = vunpack.c.l.b16 %v227
    %v801 = vunpack.c.h.b16 %v227
    %v802 = vunpack.c.l.b16 %v228
    %v803 = vunpack.c.h.b16 %v228
    %v804 = vunpack.c.l.b16 %v229
    %v805 = vunpack.c.h.b16 %v229
    %v806 = vunpack.c.l.b16 %v230
    %v807 = vunpack.c.h.b16 %v230
    %v808 = vunpack.c.l.b16 %v231
    %v809 = vunpack.c.h.b16 %v231
    %v810 = vunpack.c.l.b16 %v232
    %v811 = vunpack.c.h.b16 %v232
    %v812 = vunpack.c.l.b16 %v233
    %v813 = vunpack.c.h.b16 %v233
    %v814 = vunpack.c.l.b16 %v234
    %v815 = vunpack.c.h.b16 %v234
    %v816 = vunpack.c.l.b16 %v235
    %v817 = vunpack.c.h.b16 %v235
    %v818 = vunpack.c.l.b16 %v236
    %v819 = vunpack.c.h.b16 %v236
    %v820 = vunpack.c.l.b16 %v237
    %v821 = vunpack.c.h.b16 %v237
    %v822 = vunpack.c.l.b16 %v238
    %v823 = vunpack.c.h.b16 %v238
    %v824 = vunpack.c.l.b16 %v239
    %v825 = vunpack.c.h.b16 %v239
    %v826 = vunpack.c.l.b16 %v240
    %v827 = vunpack.c.h.b16 %v240
    %v828 = vunpack.c.l.b16 %v241
    %v829 = vunpack.c.h.b16 %v241
    %v830 = vunpack.c.l.b16 %v242
    %v831 = vunpack.c.h.b16 %v242
    %v832 = vunpack.c.l.b16 %v243
    %v833 = vunpack.c.h.b16 %v243
    %v834 = vunpack.c.l.b16 %v244
    %v835 = vunpack.c.h.b16 %v244
    %v836 = vunpack.c.l.b16 %v245
    %v837 = vunpack.c.h.b16 %v245
    %v838 = vunpack.c.l.b16 %v246
    %v839 = vunpack.c.h.b16 %v246
    %v840 = vunpack.c.l.b16 %v247
    %v841 = vunpack.c.h.b16 %v247
    %v842 = vunpack.c.l.b16 %v248
    %v843 = vunpack.c.h.b16 %v248
    %v844 = vunpack.c.l.b16 %v249
    %v845 = vunpack.c.h.b16 %v249
    %v846 = vunpack.c.l.b16 %v250
    %v847 = vunpack.c.h.b16 %v250
    %v848 = vunpack.c.l.b16 %v251
    %v849 = vunpack.c.h.b16 %v251
    %v850 = vpack.c.b16 %v470, %v466
    %v851 = vpack.c.b16 %v471, %v467
    %v852 = vpack.c.b16 %v472, %v468
    %v853 = vpack.c.b16 %v473, %v469
    %v854 = vpack.c.b16 %v478, %v474
    %v855 = vpack.c.b16 %v479, %v475
    %v856 = vpack.c.b16 %v480, %v476
    %v857 = vpack.c.b16 %v481, %v477
    %v858 = vpack.c.b16 %v486, %v482
    %v859 = vpack.c.b16 %v487, %v483
    %v860 = vpack.c.b16 %v488, %v484
    %v861 = vpack.c.b16 %v489, %v485
    %v862 = vpack.c.b16 %v494, %v490
    %v863 = vpack.c.b16 %v495, %v491
    %v864 = vpack.c.b16 %v496, %v492
    %v865 = vpack.c.b16 %v497, %v493
    %v866 = vpack.c.b16 %v502, %v498
    %v867 = vpack.c.b16 %v503, %v499
    %v868 = vpack.c.b16 %v504, %v500
    %v869 = vpack.c.b16 %v505, %v501
    %v870 = vpack.c.b16 %v510, %v506
    %v871 = vpack.c.b16 %v511, %v507
    %v872 = vpack.c.b16 %v512, %v508
    %v873 = vpack.c.b16 %v513, %v509
    %v874 = vpack.c.b16 %v518, %v514
    %v875 = vpack.c.b16 %v519, %v515
    %v876 = vpack.c.b16 %v520, %v516
    %v877 = vpack.c.b16 %v521, %v517
    %v878 = vpack.c.b16 %v526, %v522
    %v879 = vpack.c.b16 %v527, %v523
    %v880 = vpack.c.b16 %v528, %v524
    %v881 = vpack.c.b16 %v529, %v525
    %v882 = vpack.c.b16 %v534, %v530
    %v883 = vpack.c.b16 %v535, %v531
    %v884 = vpack.c.b16 %v536, %v532
    %v885 = vpack.c.b16 %v537, %v533
    %v886 = vpack.c.b16 %v542, %v538
    %v887 = vpack.c.b16 %v543, %v539
    %v888 = vpack.c.b16 %v544, %v540
    %v889 = vpack.c.b16 %v545, %v541
    %v890 = vpack.c.b16 %v550, %v546
    %v891 = vpack.c.b16 %v551, %v547
    %v892 = vpack.c.b16 %v552, %v548
    %v893 = vpack.c.b16 %v553, %v549
    %v894 = vpack.c.b16 %v558, %v554
    %v895 = vpack.c.b16 %v559, %v555
    %v896 = vpack.c.b16 %v560, %v556
    %v897 = vpack.c.b16 %v561, %v557
    %v898 = vpack.c.b16 %v566, %v562
    %v899 = vpack.c.b16 %v567, %v563
    %v900 = vpack.c.b16 %v568, %v564
    %v901 = vpack.c.b16 %v569, %v565
    %v902 = vpack.c.b16 %v574, %v570
    %v903 = vpack.c.b16 %v575, %v571
    %v904 = vpack.c.b16 %v576, %v572
    %v905 = vpack.c.b16 %v577, %v573
    %v906 = vpack.c.b16 %v582, %v578
    %v907 = vpack.c.b16 %v583, %v579
    %v908 = vpack.c.b16 %v584, %v580
    %v909 = vpack.c.b16 %v585, %v581
    %v910 = vpack.c.b16 %v590, %v586
    %v911 = vpack.c.b16 %v591, %v587
    %v912 = vpack.c.b16 %v592, %v588
    %v913 = vpack.c.b16 %v593, %v589
    %v914 = vpack.c.b16 %v598, %v594
    %v915 = vpack.c.b16 %v599, %v595
    %v916 = vpack.c.b16 %v600, %v596
    %v917 = vpack.c.b16 %v601, %v597
    %v918 = vpack.c.b16 %v606, %v602
    %v919 = vpack.c.b16 %v607, %v603
    %v920 = vpack.c.b16 %v608, %v604
    %v921 = vpack.c.b16 %v609, %v605
    %v922 = vpack.c.b16 %v614, %v610
    %v923 = vpack.c.b16 %v615, %v611
    %v924 = vpack.c.b16 %v616, %v612
    %v925 = vpack.c.b16 %v617, %v613
    %v926 = vpack.c.b16 %v622, %v618
    %v927 = vpack.c.b16 %v623, %v619
    %v928 = vpack.c.b16 %v624, %v620
    %v929 = vpack.c.b16 %v625, %v621
    %v930 = vpack.c.b16 %v630, %v626
    %v931 = vpack.c.b16 %v631, %v627
    %v932 = vpack.c.b16 %v632, %v628
    %v933 = vpack.c.b16 %v633, %v629
    %v934 = vpack.c.b16 %v638, %v634
    %v935 = vpack.c.b16 %v639, %v635
    %v936 = vpack.c.b16 %v640, %v636
    %v937 = vpack.c.b16 %v641, %v637
    %v938 = vpack.c.b16 %v646, %v642
    %v939 = vpack.c.b16 %v647, %v643
    %v940 = vpack.c.b16 %v648, %v644
    %v941 = vpack.c.b16 %v649, %v645
    %v942 = vpack.c.b16 %v654, %v650
    %v943 = vpack.c.b16 %v655, %v651
    %v944 = vpack.c.b16 %v656, %v652
    %v945 = vpack.c.b16 %v657, %v653
    %v946 = vpack.c.b16 %v662, %v658
    %v947 = vpack.c.b16 %v663, %v659
    %v948 = vpack.c.b16 %v664, %v660
    %v949 = vpack.c.b16 %v665, %v661
    %v950 = vpack.c.b16 %v670, %v666
    %v951 = vpack.c.b16 %v671, %v667
    %v952 = vpack.c.b16 %v672, %v668
    %v953 = vpack.c.b16 %v673, %v669
    %v954 = vpack.c.b16 %v678, %v674
    %v955 = vpack.c.b16 %v679, %v675
    %v956 = vpack.c.b16 %v680, %v676
    %v957 = vpack.c.b16 %v681, %v677
    %v958 = vpack.c.b16 %v686, %v682
    %v959 = vpack.c.b16 %v687, %v683
    %v960 = vpack.c.b16 %v688, %v684
    %v961 = vpack.c.b16 %v689, %v685
    %v962 = vpack.c.b16 %v694, %v690
    %v963 = vpack.c.b16 %v695, %v691
    %v964 = vpack.c.b16 %v696, %v692
    %v965 = vpack.c.b16 %v697, %v693
    %v966 = vpack.c.b16 %v702, %v698
    %v967 = vpack.c.b16 %v703, %v699
    %v968 = vpack.c.b16 %v704, %v700
    %v969 = vpack.c.b16 %v705, %v701
    %v970 = vpack.c.b16 %v710, %v706
    %v971 = vpack.c.b16 %v711, %v707
    %v972 = vpack.c.b16 %v712, %v708
    %v973 = vpack.c.b16 %v713, %v709
    %v974 = vpack.c.b16 %v718, %v714
    %v975 = vpack.c.b16 %v719, %v715
    %v976 = vpack.c.b16 %v720, %v716
    %v977 = vpack.c.b16 %v721, %v717
    %v978 = vpack.c.b16 %v726, %v722
    %v979 = vpack.c.b16 %v727, %v723
    %v980 = vpack.c.b16 %v728, %v724
    %v981 = vpack.c.b16 %v729, %v725
    %v982 = vpack.c.b16 %v734, %v730
    %v983 = vpack.c.b16 %v735, %v731
    %v984 = vpack.c.b16 %v736, %v732
    %v985 = vpack.c.b16 %v737, %v733
    %v986 = vpack.c.b16 %v742, %v738
    %v987 = vpack.c.b16 %v743, %v739
    %v988 = vpack.c.b16 %v744, %v740
    %v989 = vpack.c.b16 %v745, %v741
    %v990 = vpack.c.b16 %v750, %v746
    %v991 = vpack.c.b16 %v751, %v747
    %v992 = vpack.c.b16 %v752, %v748
    %v993 = vpack.c.b16 %v753, %v749
    %v994 = vpack.c.b16 %v758, %v754
    %v995 = vpack.c.b16 %v759, %v755
    %v996 = vpack.c.b16 %v760, %v756
    %v997 = vpack.c.b16 %v761, %v757
    %v998 = vpack.c.b16 %v766, %v762
    %v999 = vpack.c.b16 %v767, %v763
    %v1000 = vpack.c.b16 %v768, %v764
    %v1001 = vpack.c.b16 %v769, %v765
    %v1002 = vpack.c.b16 %v774, %v770
    %v1003 = vpack.c.b16 %v775, %v771
    %v1004 = vpack.c.b16 %v776, %v772
    %v1005 = vpack.c.b16 %v777, %v773
    %v1006 = vpack.c.b16 %v782, %v778
    %v1007 = vpack.c.b16 %v783, %v779
    %v1008 = vpack.c.b16 %v784, %v780
    %v1009 = vpack.c.b16 %v785, %v781
    %v1010 = vpack.c.b16 %v790, %v786
    %v1011 = vpack.c.b16 %v791, %v787
    %v1012 = vpack.c.b16 %v792, %v788
    %v1013 = vpack.c.b16 %v793, %v789
    %v1014 = vpack.c.b16 %v798, %v794
    %v1015 = vpack.c.b16 %v799, %v795
    %v1016 = vpack.c.b16 %v800, %v796
    %v1017 = vpack.c.b16 %v801, %v797
    %v1018 = vpack.c.b16 %v806, %v802
    %v1019 = vpack.c.b16 %v807, %v803
    %v1020 = vpack.c.b16 %v808, %v804
    %v1021 = vpack.c.b16 %v809, %v805
    %v1022 = vpack.c.b16 %v814, %v810
    %v1023 = vpack.c.b16 %v815, %v811
    %v1024 = vpack.c.b16 %v816, %v812
    %v1025 = vpack.c.b16 %v817, %v813
    %v1026 = vpack.c.b16 %v822, %v818
    %v1027 = vpack.c.b16 %v823, %v819
    %v1028 = vpack.c.b16 %v824, %v820
    %v1029 = vpack.c.b16 %v825, %v821
    %v1030 = vpack.c.b16 %v830, %v826
    %v1031 = vpack.c.b16 %v831, %v827
    %v1032 = vpack.c.b16 %v832, %v828
    %v1033 = vpack.c.b16 %v833, %v829
    %v1034 = vpack.c.b16 %v838, %v834
    %v1035 = vpack.c.b16 %v839, %v835
    %v1036 = vpack.c.b16 %v840, %v836
    %v1037 = vpack.c.b16 %v841, %v837
    %v1038 = vpack.c.b16 %v846, %v842
    %v1039 = vpack.c.b16 %v847, %v843
    %v1040 = vpack.c.b16 %v848, %v844
    %v1041 = vpack.c.b16 %v849, %v845
    %1234 = vmatprep.subr.bf16.mxu0 %v851
    %1235 = vmatpush1.bf16.msra.mxu0 %v850
    %1236 = vmatprep.subr.bf16.mxu0 %v855
    %1237 = vmatpush1.bf16.msra.mxu0 %v854
    %1238 = vmatprep.subr.bf16.mxu0 %v859
    %1239 = vmatpush1.bf16.msra.mxu0 %v858
    %1240 = vmatprep.subr.bf16.mxu0 %v863
    %1241 = vmatpush1.bf16.msra.mxu0 %v862
    %1242 = vmatprep.subr.bf16.mxu0 %v867
    %1243 = vmatpush1.bf16.msra.mxu0 %v866
    %1244 = vmatprep.subr.bf16.mxu0 %v871
    %1245 = vmatpush1.bf16.msra.mxu0 %v870
    %1246 = vmatprep.subr.bf16.mxu0 %v875
    %1247 = vmatpush1.bf16.msra.mxu0 %v874
    %1248 = vmatprep.subr.bf16.mxu0 %v879
    %1249 = vmatpush1.bf16.msra.mxu0 %v878
    %1250 = vmatprep.subr.bf16.mxu0 %v883
    %1251 = vmatpush1.bf16.msra.mxu0 %v882
    %1252 = vmatprep.subr.bf16.mxu0 %v887
    %1253 = vmatpush1.bf16.msra.mxu0 %v886
    %1254 = vmatprep.subr.bf16.mxu0 %v891
    %1255 = vmatpush1.bf16.msra.mxu0 %v890
    %1256 = vmatprep.subr.bf16.mxu0 %v895
    %1257 = vmatpush1.bf16.msra.mxu0 %v894
    %1258 = vmatprep.subr.bf16.mxu0 %v899
    %1259 = vmatpush1.bf16.msra.mxu0 %v898
    %1260 = vmatprep.subr.bf16.mxu0 %v903
    %1261 = vmatpush1.bf16.msra.mxu0 %v902
    %1262 = vmatprep.subr.bf16.mxu0 %v907
    %1263 = vmatpush1.bf16.msra.mxu0 %v906
    %1264 = vmatprep.subr.bf16.mxu0 %v911
    %1265 = vmatpush1.bf16.msra.mxu0 %v910
    %1266 = vmatprep.mubr.bf16.mxu0 %v55
    %1267 = vmatmul.mubr.bf16.gmra.mrb[0].mxu0 %v54
    %v1268 = vpop.f32.mrb[0].mxu0
    %v1269 = vadd.f32 %v257, %v1268
    %v1270 = vpop.f32.mrb[0].mxu0
    %v1271 = vadd.f32 %v261, %v1270
    %v1272 = vpop.f32.mrb[0].mxu0
    %v1273 = vpop.f32.mrb[0].mxu0
    %1274 = vdwg.mxu0
    %1275 = vmatprep.subr.bf16.mxu0 %v915
    %1276 = vmatpush1.bf16.msra.mxu0 %v914
    %1277 = vmatprep.subr.bf16.mxu0 %v919
    %1278 = vmatpush1.bf16.msra.mxu0 %v918
    %1279 = vmatprep.subr.bf16.mxu0 %v923
    %1280 = vmatpush1.bf16.msra.mxu0 %v922
    %1281 = vmatprep.subr.bf16.mxu0 %v927
    %1282 = vmatpush1.bf16.msra.mxu0 %v926
    %1283 = vmatprep.subr.bf16.mxu0 %v931
    %1284 = vmatpush1.bf16.msra.mxu0 %v930
    %1285 = vmatprep.subr.bf16.mxu0 %v935
    %1286 = vmatpush1.bf16.msra.mxu0 %v934
    %1287 = vmatprep.subr.bf16.mxu0 %v939
    %1288 = vmatpush1.bf16.msra.mxu0 %v938
    %1289 = vmatprep.subr.bf16.mxu0 %v943
    %1290 = vmatpush1.bf16.msra.mxu0 %v942
    %1291 = vmatprep.subr.bf16.mxu0 %v947
    %1292 = vmatpush1.bf16.msra.mxu0 %v946
    %1293 = vmatprep.subr.bf16.mxu0 %v951
    %1294 = vmatpush1.bf16.msra.mxu0 %v950
    %1295 = vmatprep.subr.bf16.mxu0 %v955
    %1296 = vmatpush1.bf16.msra.mxu0 %v954
    %1297 = vmatprep.subr.bf16.mxu0 %v959
    %1298 = vmatpush1.bf16.msra.mxu0 %v958
    %1299 = vmatprep.subr.bf16.mxu0 %v963
    %1300 = vmatpush1.bf16.msra.mxu0 %v962
    %1301 = vmatprep.subr.bf16.mxu0 %v967
    %1302 = vmatpush1.bf16.msra.mxu0 %v966
    %1303 = vmatprep.subr.bf16.mxu0 %v971
    %1304 = vmatpush1.bf16.msra.mxu0 %v970
    %1305 = vmatprep.subr.bf16.mxu0 %v975
    %1306 = vmatpush1.bf16.msra.mxu0 %v974
    %1307 = vmatprep.mubr.bf16.mxu0 %v57
    %1308 = vmatmul.mubr.bf16.gmra.mrb[0].mxu0 %v56
    %v1309 = vpop.f32.mrb[0].mxu0
    %v1310 = vadd.f32 %v1269, %v1309
    %v1311 = vpop.f32.mrb[0].mxu0
    %v1312 = vadd.f32 %v1271, %v1311
    %v1313 = vpop.f32.mrb[0].mxu0
    %v1314 = vpop.f32.mrb[0].mxu0
    %1315 = vdwg.mxu0
    %1316 = vmatprep.subr.bf16.mxu0 %v979
    %1317 = vmatpush1.bf16.msra.mxu0 %v978
    %1318 = vmatprep.subr.bf16.mxu0 %v983
    %1319 = vmatpush1.bf16.msra.mxu0 %v982
    %1320 = vmatprep.subr.bf16.mxu0 %v987
    %1321 = vmatpush1.bf16.msra.mxu0 %v986
    %1322 = vmatprep.subr.bf16.mxu0 %v991
    %1323 = vmatpush1.bf16.msra.mxu0 %v990
    %1324 = vmatprep.subr.bf16.mxu0 %v995
    %1325 = vmatpush1.bf16.msra.mxu0 %v994
    %1326 = vmatprep.subr.bf16.mxu0 %v999
    %1327 = vmatpush1.bf16.msra.mxu0 %v998
    %1328 = vmatprep.subr.bf16.mxu0 %v1003
    %1329 = vmatpush1.bf16.msra.mxu0 %v1002
    %1330 = vmatprep.subr.bf16.mxu0 %v1007
    %1331 = vmatpush1.bf16.msra.mxu0 %v1006
    %1332 = vmatprep.subr.bf16.mxu0 %v1011
    %1333 = vmatpush1.bf16.msra.mxu0 %v1010
    %1334 = vmatprep.subr.bf16.mxu0 %v1015
    %1335 = vmatpush1.bf16.msra.mxu0 %v1014
    %1336 = vmatprep.subr.bf16.mxu0 %v1019
    %1337 = vmatpush1.bf16.msra.mxu0 %v1018
    %1338 = vmatprep.subr.bf16.mxu0 %v1023
    %1339 = vmatpush1.bf16.msra.mxu0 %v1022
    %1340 = vmatprep.subr.bf16.mxu0 %v1027
    %1341 = vmatpush1.bf16.msra.mxu0 %v1026
    %1342 = vmatprep.subr.bf16.mxu0 %v1031
    %1343 = vmatpush1.bf16.msra.mxu0 %v1030
    %1344 = vmatprep.subr.bf16.mxu0 %v1035
    %1345 = vmatpush1.bf16.msra.mxu0 %v1034
    %1346 = vmatprep.subr.bf16.mxu0 %v1039
    %1347 = vmatpush1.bf16.msra.mxu0 %v1038
    %1348 = vmatprep.mubr.bf16.mxu0 %v59
    %1349 = vmatmul.mubr.bf16.gmra.mrb[0].mxu0 %v58
    %v1350 = vpop.f32.mrb[0].mxu0
    %v1351 = vadd.f32 %v1310, %v1350
    %v1352 = vpop.f32.mrb[0].mxu0
    %v1353 = vadd.f32 %v1312, %v1352
    %v1354 = vpop.f32.mrb[0].mxu0
    %v1355 = vpop.f32.mrb[0].mxu0
    %1356 = vdwg.mxu0
    %1357 = vmatprep.subr.bf16.mxu0 %v853
    %1358 = vmatpush1.bf16.msra.mxu0 %v852
    %1359 = vmatprep.subr.bf16.mxu0 %v857
    %1360 = vmatpush1.bf16.msra.mxu0 %v856
    %1361 = vmatprep.subr.bf16.mxu0 %v861
    %1362 = vmatpush1.bf16.msra.mxu0 %v860
    %1363 = vmatprep.subr.bf16.mxu0 %v865
    %1364 = vmatpush1.bf16.msra.mxu0 %v864
    %1365 = vmatprep.subr.bf16.mxu0 %v869
    %1366 = vmatpush1.bf16.msra.mxu0 %v868
    %1367 = vmatprep.subr.bf16.mxu0 %v873
    %1368 = vmatpush1.bf16.msra.mxu0 %v872
    %1369 = vmatprep.subr.bf16.mxu0 %v877
    %1370 = vmatpush1.bf16.msra.mxu0 %v876
    %1371 = vmatprep.subr.bf16.mxu0 %v881
    %1372 = vmatpush1.bf16.msra.mxu0 %v880
    %1373 = vmatprep.subr.bf16.mxu0 %v885
    %1374 = vmatpush1.bf16.msra.mxu0 %v884
    %1375 = vmatprep.subr.bf16.mxu0 %v889
    %1376 = vmatpush1.bf16.msra.mxu0 %v888
    %1377 = vmatprep.subr.bf16.mxu0 %v893
    %1378 = vmatpush1.bf16.msra.mxu0 %v892
    %1379 = vmatprep.subr.bf16.mxu0 %v897
    %1380 = vmatpush1.bf16.msra.mxu0 %v896
    %1381 = vmatprep.subr.bf16.mxu0 %v901
    %1382 = vmatpush1.bf16.msra.mxu0 %v900
    %1383 = vmatprep.subr.bf16.mxu0 %v905
    %1384 = vmatpush1.bf16.msra.mxu0 %v904
    %1385 = vmatprep.subr.bf16.mxu0 %v909
    %1386 = vmatpush1.bf16.msra.mxu0 %v908
    %1387 = vmatprep.subr.bf16.mxu0 %v913
    %1388 = vmatpush1.bf16.msra.mxu0 %v912
    %1389 = vmatprep.mubr.bf16.mxu0 %v55
    %1390 = vmatmul.mubr.bf16.gmra.mrb[0].mxu0 %v54
    %v1391 = vpop.f32.mrb[0].mxu0
    %v1392 = vadd.f32 %v265, %v1391
    %v1393 = vpop.f32.mrb[0].mxu0
    %v1394 = vadd.f32 %v269, %v1393
    %v1395 = vpop.f32.mrb[0].mxu0
    %v1396 = vpop.f32.mrb[0].mxu0
    %1397 = vdwg.mxu0
    %1398 = vmatprep.subr.bf16.mxu0 %v917
    %1399 = vmatpush1.bf16.msra.mxu0 %v916
    %1400 = vmatprep.subr.bf16.mxu0 %v921
    %1401 = vmatpush1.bf16.msra.mxu0 %v920
    %1402 = vmatprep.subr.bf16.mxu0 %v925
    %1403 = vmatpush1.bf16.msra.mxu0 %v924
    %1404 = vmatprep.subr.bf16.mxu0 %v929
    %1405 = vmatpush1.bf16.msra.mxu0 %v928
    %1406 = vmatprep.subr.bf16.mxu0 %v933
    %1407 = vmatpush1.bf16.msra.mxu0 %v932
    %1408 = vmatprep.subr.bf16.mxu0 %v937
    %1409 = vmatpush1.bf16.msra.mxu0 %v936
    %1410 = vmatprep.subr.bf16.mxu0 %v941
    %1411 = vmatpush1.bf16.msra.mxu0 %v940
    %1412 = vmatprep.subr.bf16.mxu0 %v945
    %1413 = vmatpush1.bf16.msra.mxu0 %v944
    %1414 = vmatprep.subr.bf16.mxu0 %v949
    %1415 = vmatpush1.bf16.msra.mxu0 %v948
    %1416 = vmatprep.subr.bf16.mxu0 %v953
    %1417 = vmatpush1.bf16.msra.mxu0 %v952
    %1418 = vmatprep.subr.bf16.mxu0 %v957
    %1419 = vmatpush1.bf16.msra.mxu0 %v956
    %1420 = vmatprep.subr.bf16.mxu0 %v961
    %1421 = vmatpush1.bf16.msra.mxu0 %v960
    %1422 = vmatprep.subr.bf16.mxu0 %v965
    %1423 = vmatpush1.bf16.msra.mxu0 %v964
    %1424 = vmatprep.subr.bf16.mxu0 %v969
    %1425 = vmatpush1.bf16.msra.mxu0 %v968
    %1426 = vmatprep.subr.bf16.mxu0 %v973
    %1427 = vmatpush1.bf16.msra.mxu0 %v972
    %1428 = vmatprep.subr.bf16.mxu0 %v977
    %1429 = vmatpush1.bf16.msra.mxu0 %v976
    %1430 = vmatprep.mubr.bf16.mxu0 %v57
    %1431 = vmatmul.mubr.bf16.gmra.mrb[0].mxu0 %v56
    %v1432 = vpop.f32.mrb[0].mxu0
    %v1433 = vadd.f32 %v1392, %v1432
    %v1434 = vpop.f32.mrb[0].mxu0
    %v1435 = vadd.f32 %v1394, %v1434
    %v1436 = vpop.f32.mrb[0].mxu0
    %v1437 = vpop.f32.mrb[0].mxu0
    %1438 = vdwg.mxu0
    %1439 = vmatprep.subr.bf16.mxu0 %v981
    %1440 = vmatpush1.bf16.msra.mxu0 %v980
    %1441 = vmatprep.subr.bf16.mxu0 %v985
    %1442 = vmatpush1.bf16.msra.mxu0 %v984
    %1443 = vmatprep.subr.bf16.mxu0 %v989
    %1444 = vmatpush1.bf16.msra.mxu0 %v988
    %1445 = vmatprep.subr.bf16.mxu0 %v993
    %1446 = vmatpush1.bf16.msra.mxu0 %v992
    %1447 = vmatprep.subr.bf16.mxu0 %v997
    %1448 = vmatpush1.bf16.msra.mxu0 %v996
    %1449 = vmatprep.subr.bf16.mxu0 %v1001
    %1450 = vmatpush1.bf16.msra.mxu0 %v1000
    %1451 = vmatprep.subr.bf16.mxu0 %v1005
    %1452 = vmatpush1.bf16.msra.mxu0 %v1004
    %1453 = vmatprep.subr.bf16.mxu0 %v1009
    %1454 = vmatpush1.bf16.msra.mxu0 %v1008
    %1455 = vmatprep.subr.bf16.mxu0 %v1013
    %1456 = vmatpush1.bf16.msra.mxu0 %v1012
    %1457 = vmatprep.subr.bf16.mxu0 %v1017
    %1458 = vmatpush1.bf16.msra.mxu0 %v1016
    %1459 = vmatprep.subr.bf16.mxu0 %v1021
    %1460 = vmatpush1.bf16.msra.mxu0 %v1020
    %1461 = vmatprep.subr.bf16.mxu0 %v1025
    %1462 = vmatpush1.bf16.msra.mxu0 %v1024
    %1463 = vmatprep.subr.bf16.mxu0 %v1029
    %1464 = vmatpush1.bf16.msra.mxu0 %v1028
    %1465 = vmatprep.subr.bf16.mxu0 %v1033
    %1466 = vmatpush1.bf16.msra.mxu0 %v1032
    %1467 = vmatprep.subr.bf16.mxu0 %v1037
    %1468 = vmatpush1.bf16.msra.mxu0 %v1036
    %1469 = vmatprep.subr.bf16.mxu0 %v1041
    %1470 = vmatpush1.bf16.msra.mxu0 %v1040
    %1471 = vmatprep.mubr.bf16.mxu0 %v59
    %1472 = vmatmul.mubr.bf16.gmra.mrb[0].mxu0 %v58
    %v1473 = vpop.f32.mrb[0].mxu0
    %v1474 = vadd.f32 %v1433, %v1473
    %v1475 = vpop.f32.mrb[0].mxu0
    %v1476 = vadd.f32 %v1435, %v1475
    %v1477 = vpop.f32.mrb[0].mxu0
    %v1478 = vpop.f32.mrb[0].mxu0
    %1479 = vdwg.mxu0
    %v1480 = vmax.f32 %v1351, 0.0
    %v1481 = vmax.f32 %v1353, 0.0
    %v1482 = vmax.f32 %v1474, 0.0
    %v1483 = vmax.f32 %v1476, 0.0
    %v1484 = vld [vmem:[%s3] sm:$0xf]
    %v1486 = vlaneseq
    %v1487 = vshrl.u32 %v1486, 7
    %v1488 = vsub.s32 0, %v1487
    %v1489 = vrot.slane %v1484, %v1488
    %v1490 = vlaneseq
    %v1491 = vshrl.u32 %v1490, 7
    %v1492 = vsub.s32 1, %v1491
    %v1493 = vrot.slane %v1484, %v1492
    %v1494 = vlaneseq
    %v1495 = vshrl.u32 %v1494, 7
    %v1496 = vsub.s32 2, %v1495
    %v1497 = vrot.slane %v1484, %v1496
    %v1498 = vlaneseq
    %v1499 = vshrl.u32 %v1498, 7
    %v1500 = vsub.s32 3, %v1499
    %v1501 = vrot.slane %v1484, %v1500
    %v1506 = vmul.f32 %v1480, %v1489
    %v1507 = vmul.f32 %v1481, %v1493
    %v1508 = vmul.f32 %v1482, %v1497
    %v1509 = vmul.f32 %v1483, %v1501
    %v1510 = vadd.f32 %v1506, %v1507
    %v1511 = vadd.f32 %v1510, %v1508
    %v1512 = vadd.f32 %v1511, %v1509
    %1513 = vadd.xlane.f32.xlu0 %v1512
    %v1514 = vpop.xlane.xlu0 %1513
    %v1515 = vld [vmem:[#allocation2] sm:$0x1]
    %v1517 = vlaneseq
    %v1518 = vshrl.u32 %v1517, 7
    %v1519 = vsub.s32 0, %v1518
    %v1520 = vrot.slane %v1515, %v1519
    %v1522 = vadd.f32 %v1514, %v1520
    %vm1523 = vcmask 7168
    %1524 = vst.msk [vmem:[%s5] sm:$0xff] %vm1523, %v1522
    // Predicated region
    $region30: #{tpu_custom_call.1} parent=1 // pred_check
      _
    $region31: #{tpu_custom_call.1} parent=1 // pred_check_branch
      %1526 = sbr.rel (0) target = $region33
    $region32: #{tpu_custom_call.1} parent=1 // pred_region
      _
    $region33: #{tpu_custom_call.1} parent=1 // pred_fallthru
      _
    // Predicated region
    $region34: #{tpu_custom_call.1} parent=1 // pred_check
      _
    $region35: #{tpu_custom_call.1} parent=1 // pred_check_branch
      %1528 = sbr.rel (0) target = $region37
    $region36: #{tpu_custom_call.1} parent=1 // pred_region
      _
    $region37: #{tpu_custom_call.1} parent=1 // pred_fallthru
      _
    %1529 = vsyncpa [#allocation4], 1
    %1530 = vsyncpa [#allocation6], 1

</llo_original>
